<compile_context>
chip_gen: v6e
topology: v6e:2x2x1
jax: 0.10.0
libtpu: 0.0.40
codegen_flags: <defaults>
</compile_context>

<pallas_src>
import functools

import jax
import jax.numpy as jnp
from jax.experimental import pallas as pl
from jax.experimental.pallas import tpu as pltpu

P = 4  # block-diagonal batch-packing factor (4 batch rows per packed row)


def mlp_kernel(x_ref, w1_ref, b1_ref, w2_ref, b2_ref, w3_ref, b3_ref, o_ref):
    """Packed MLP step.

    x_ref: (TB4, 64)  -- each packed row = 4 consecutive batch rows x 16 feats.
    Weights are block-diagonal (4 replicas of W.T), so the four 16-feature
    groups of every packed row flow through independent copies of the MLP.
    MXU matmuls use bf16 operands with f32 accumulation; bias/ReLU stay f32.
    """
    x = x_ref[...].astype(jnp.bfloat16)                             # (TB4, 64)

    # Layer 1: (TB4,64) @ (64,256) -> (TB4,256)
    h1 = jnp.dot(x, w1_ref[...], preferred_element_type=jnp.float32)
    h1 = jnp.maximum(h1 + b1_ref[...], 0.0)                         # b1d: (1,256)

    # Layer 2: (TB4,256) @ (256,256) -> (TB4,256)  (full 256-wide MXU tile)
    h2 = jnp.dot(h1.astype(jnp.bfloat16), w2_ref[...],
                 preferred_element_type=jnp.float32)
    h2 = jnp.maximum(h2 + b2_ref[...], 0.0)

    # Layer 3: (TB4,256) @ (256,64) -> (TB4,64)   (no activation)
    out = jnp.dot(h2.astype(jnp.bfloat16), w3_ref[...],
                  preferred_element_type=jnp.float32)
    o_ref[...] = (out + b3_ref[...]).astype(o_ref.dtype)


def _round_up(n, m):
    return (n + m - 1) // m * m


def _block_diag_t(w, p):
    """block_diag(w.T, ..., w.T), p copies: (out, in) -> (p*in, p*out)."""
    o, i = w.shape
    wt = w.T
    bd = jnp.zeros((p * i, p * o), wt.dtype)
    for k in range(p):
        bd = bd.at[k * i:(k + 1) * i, k * o:(k + 1) * o].set(wt)
    return bd


@functools.partial(jax.jit, static_argnames=("block_rows",))
def model_multi_forward(x, params, *, block_rows=2048):
    """x: (B, 16) float32. params: w{1,2,3} in PyTorch [out,in] layout, b{1,2,3} as (out,)."""
    B, f_in = x.shape
    assert f_in == 16
    f_out = params["w3"].shape[0]                                   # 16

    # Block-diagonal packed weights / tiled biases (tiny, built once per call).
    # TODO(synk): for bit-closer parity with PyTorch f32 matmuls, keep f32
    # operands (the kernel works unchanged); bf16 operands chosen for speed.
    w1d = _block_diag_t(params["w1"], P).astype(jnp.bfloat16)       # (64, 256)
    w2d = _block_diag_t(params["w2"], P).astype(jnp.bfloat16)       # (256, 256)
    w3d = _block_diag_t(params["w3"], P).astype(jnp.bfloat16)       # (256, 64)
    b1d = jnp.tile(params["b1"], P)[None, :].astype(jnp.float32)    # (1, 256)
    b2d = jnp.tile(params["b2"], P)[None, :].astype(jnp.float32)    # (1, 256)
    b3d = jnp.tile(params["b3"], P)[None, :].astype(jnp.float32)    # (1, 64)

    # Packed-row geometry: >=8 rows (sublane granularity), capped at
    # `block_rows`, and sized so the grid has >= 2 steps whenever possible
    # (lets the "parallel" axis split across v7x's two TensorCores).
    B4 = pl.cdiv(B, P)
    tb4 = max(8, min(block_rows, _round_up(pl.cdiv(B4, 2), 8)))
    B4p = _round_up(B4, tb4)
    Bp = B4p * P

    if Bp != B:
        # Zero-pad trailing batch rows: safe (rows are independent, padded
        # rows are sliced off below); only triggers for non-tile-aligned B.
        x = jnp.pad(x, ((0, Bp - B), (0, 0)))
    # Layout-identity reshape of a contiguous array -> free bitcast, no copy.
    xr = x.reshape(B4p, P * f_in)                                   # (B4p, 64)

    grid = (B4p // tb4,)
    # Constant index_map -> DMA'd once, VMEM-resident across all grid steps.
    # TODO(synk): pipeline_mode=pl.Buffered(1) would drop the (negligible)
    # second weight buffer; omitted to stay conservative across jax versions.
    const = lambda a: pl.BlockSpec(a.shape, lambda i: (0, 0))

    outr = pl.pallas_call(
        mlp_kernel,
        out_shape=jax.ShapeDtypeStruct((B4p, P * f_out), jnp.float32),
        grid=grid,
        in_specs=[
            pl.BlockSpec((tb4, P * f_in), lambda i: (i, 0)),        # x tile
            const(w1d), const(b1d),
            const(w2d), const(b2d),
            const(w3d), const(b3d),
        ],
        out_specs=pl.BlockSpec((tb4, P * f_out), lambda i: (i, 0)),
        compiler_params=pltpu.CompilerParams(
            # Batch tiles are independent -> megacore sharding where available.
            # TODO(synk): pltpu.CORE_PARALLEL may shard more explicitly on v7x;
            # "parallel" kept for portability across v5e/v6e/v7x.
            dimension_semantics=("parallel",),
        ),
    )(xr, w1d, b1d, w2d, b2d, w3d, b3d)

    out = outr.reshape(Bp, f_out)                                   # free bitcast
    if Bp != B:
        out = out[:B]
    return out


def init_params(key):
    """nn.Linear-style init (uniform +-1/sqrt(fan_in)); weights [out,in], biases [out]."""
    def linear(k, fan_in, fan_out):
        kw, kb = jax.random.split(k)
        bound = 1.0 / jnp.sqrt(fan_in)
        w = jax.random.uniform(kw, (fan_out, fan_in), jnp.float32, -bound, bound)
        b = jax.random.uniform(kb, (fan_out,), jnp.float32, -bound, bound)
        return w, b

    k1, k2, k3 = jax.random.split(key, 3)
    w1, b1 = linear(k1, 16, 64)
    w2, b2 = linear(k2, 64, 64)
    w3, b3 = linear(k3, w2.shape[0], 16)    # fan_in tied to layer-2 width (64)
    return dict(w1=w1, b1=b1, w2=w2, b2=b2, w3=w3, b3=b3)


if __name__ == "__main__":
    key = jax.random.PRNGKey(0)
    kx, kp = jax.random.split(key)

    B = 256                                 # small; exercises packing + a 2-step grid
    x = jax.random.normal(kx, (B, 16), dtype=jnp.float32)
    params = init_params(kp)

    out = model_multi_forward(x, params)
    out = jax.block_until_ready(out)

    # Pure-JAX references (PyTorch semantics: x @ W.T + b per layer).
    def ref(xx, p, op_dtype):
        def lin(h, w, b):
            return jnp.dot(h.astype(op_dtype), w.astype(op_dtype).T,
                           preferred_element_type=jnp.float32) + b
        h = jnp.maximum(lin(xx, p["w1"], p["b1"]), 0.0)
        h = jnp.maximum(lin(h, p["w2"], p["b2"]), 0.0)
        return lin(h, p["w3"], p["b3"])

    expected_bf16 = ref(x, params, jnp.bfloat16)   # matmul precision matched to kernel
    expected_f32 = ref(x, params, jnp.float32)     # full-precision reference

    assert out.shape == (B, 16)
    assert jnp.allclose(out, expected_bf16, atol=1e-2, rtol=1e-2), \
        "mismatch vs bf16-matched reference"
    assert jnp.allclose(out, expected_f32, atol=1e-1, rtol=1e-1), \
        "mismatch vs f32 reference"

    print("KERNEL_OK")
</pallas_src>

<mosaic_0001>
module attributes {stable_mosaic.version = 11 : i64} {
  func.func @mlp_kernel(%arg0: i32, %arg1: memref<32x64xf32, #tpu.memory_space<vmem>>, %arg2: memref<64x256xbf16, #tpu.memory_space<vmem>>, %arg3: memref<1x256xf32, #tpu.memory_space<vmem>>, %arg4: memref<256x256xbf16, #tpu.memory_space<vmem>>, %arg5: memref<1x256xf32, #tpu.memory_space<vmem>>, %arg6: memref<256x64xbf16, #tpu.memory_space<vmem>>, %arg7: memref<1x64xf32, #tpu.memory_space<vmem>>, %arg8: memref<32x64xf32, #tpu.memory_space<vmem>>) attributes {dimension_semantics = [#tpu.dimension_semantics<parallel>], iteration_bounds = array<i64: 2>, scalar_prefetch = 0 : i64, scratch_operands = 0 : i64, tpu.core_type = #tpu.core_type<tc>, window_params = [{transform_indices = @transform_0, window_bounds = array<i64: 32, 64>}, {pipeline_mode = #tpu.pipeline_mode<synchronous>, transform_indices = @transform_1, window_bounds = array<i64: 64, 256>}, {pipeline_mode = #tpu.pipeline_mode<synchronous>, transform_indices = @transform_2, window_bounds = array<i64: 1, 256>}, {pipeline_mode = #tpu.pipeline_mode<synchronous>, transform_indices = @transform_3, window_bounds = array<i64: 256, 256>}, {pipeline_mode = #tpu.pipeline_mode<synchronous>, transform_indices = @transform_4, window_bounds = array<i64: 1, 256>}, {pipeline_mode = #tpu.pipeline_mode<synchronous>, transform_indices = @transform_5, window_bounds = array<i64: 256, 64>}, {pipeline_mode = #tpu.pipeline_mode<synchronous>, transform_indices = @transform_6, window_bounds = array<i64: 1, 64>}, {transform_indices = @transform_7, window_bounds = array<i64: 32, 64>}]} {
    %c0 = arith.constant 0 : index
    %c0_0 = arith.constant 0 : index
    %0 = vector.load %arg1[%c0, %c0_0] : memref<32x64xf32, #tpu.memory_space<vmem>>, vector<32x64xf32>
    %1 = arith.truncf %0 : vector<32x64xf32> to vector<32x64xbf16>
    %c0_1 = arith.constant 0 : index
    %c0_2 = arith.constant 0 : index
    %2 = vector.load %arg2[%c0_1, %c0_2] : memref<64x256xbf16, #tpu.memory_space<vmem>>, vector<64x256xbf16>
    %cst = arith.constant dense<0.000000e+00> : vector<32x256xf32>
    %3 = tpu.matmul %1, %2, %cst {dimension_numbers = #tpu.dot_dimension_numbers<[1], [0], [0], [1], [0, 0, 1, 1], [], []>} : vector<32x64xbf16>, vector<64x256xbf16>, vector<32x256xf32> -> vector<32x256xf32>
    %c0_3 = arith.constant 0 : index
    %c0_4 = arith.constant 0 : index
    %4 = vector.load %arg3[%c0_3, %c0_4] : memref<1x256xf32, #tpu.memory_space<vmem>>, vector<1x256xf32>
    %5 = vector.broadcast %4 : vector<1x256xf32> to vector<32x256xf32>
    %6 = arith.addf %3, %5 : vector<32x256xf32>
    %cst_5 = arith.constant 0.000000e+00 : f32
    %7 = vector.broadcast %cst_5 : f32 to vector<32x256xf32>
    %8 = arith.maximumf %6, %7 : vector<32x256xf32>
    %9 = arith.truncf %8 : vector<32x256xf32> to vector<32x256xbf16>
    %c0_6 = arith.constant 0 : index
    %c0_7 = arith.constant 0 : index
    %10 = vector.load %arg4[%c0_6, %c0_7] : memref<256x256xbf16, #tpu.memory_space<vmem>>, vector<256x256xbf16>
    %cst_8 = arith.constant dense<0.000000e+00> : vector<32x256xf32>
    %11 = tpu.matmul %9, %10, %cst_8 {dimension_numbers = #tpu.dot_dimension_numbers<[1], [0], [0], [1], [0, 0, 1, 1], [], []>} : vector<32x256xbf16>, vector<256x256xbf16>, vector<32x256xf32> -> vector<32x256xf32>
    %c0_9 = arith.constant 0 : index
    %c0_10 = arith.constant 0 : index
    %12 = vector.load %arg5[%c0_9, %c0_10] : memref<1x256xf32, #tpu.memory_space<vmem>>, vector<1x256xf32>
    %13 = vector.broadcast %12 : vector<1x256xf32> to vector<32x256xf32>
    %14 = arith.addf %11, %13 : vector<32x256xf32>
    %cst_11 = arith.constant 0.000000e+00 : f32
    %15 = vector.broadcast %cst_11 : f32 to vector<32x256xf32>
    %16 = arith.maximumf %14, %15 : vector<32x256xf32>
    %17 = arith.truncf %16 : vector<32x256xf32> to vector<32x256xbf16>
    %c0_12 = arith.constant 0 : index
    %c0_13 = arith.constant 0 : index
    %18 = vector.load %arg6[%c0_12, %c0_13] : memref<256x64xbf16, #tpu.memory_space<vmem>>, vector<256x64xbf16>
    %cst_14 = arith.constant dense<0.000000e+00> : vector<32x64xf32>
    %19 = tpu.matmul %17, %18, %cst_14 {dimension_numbers = #tpu.dot_dimension_numbers<[1], [0], [0], [1], [0, 0, 1, 1], [], []>} : vector<32x256xbf16>, vector<256x64xbf16>, vector<32x64xf32> -> vector<32x64xf32>
    %c0_15 = arith.constant 0 : index
    %c0_16 = arith.constant 0 : index
    %20 = vector.load %arg7[%c0_15, %c0_16] : memref<1x64xf32, #tpu.memory_space<vmem>>, vector<1x64xf32>
    %21 = vector.broadcast %20 : vector<1x64xf32> to vector<32x64xf32>
    %22 = arith.addf %19, %21 : vector<32x64xf32>
    %c0_17 = arith.constant 0 : index
    %c0_18 = arith.constant 0 : index
    %23 = vector.load %arg8[%c0_17, %c0_18] : memref<32x64xf32, #tpu.memory_space<vmem>>, vector<32x64xf32>
    tpu.vector_store %arg8[%c0_17, %c0_18], %22 {strides = array<i32>} : memref<32x64xf32, #tpu.memory_space<vmem>>, vector<32x64xf32>,
    return
  }
  func.func @transform_0(%arg0: i32) -> (i32, i32) {
    %c0_i32 = arith.constant 0 : i32
    %c0_i32_0 = arith.constant 0 : i32
    return %arg0, %c0_i32 : i32, i32
  }
  func.func @transform_1(%arg0: i32) -> (i32, i32) {
    %c0_i32 = arith.constant 0 : i32
    %c0_i32_0 = arith.constant 0 : i32
    %c0_i32_1 = arith.constant 0 : i32
    return %c0_i32, %c0_i32_0 : i32, i32
  }
  func.func @transform_2(%arg0: i32) -> (i32, i32) {
    %c0_i32 = arith.constant 0 : i32
    %c0_i32_0 = arith.constant 0 : i32
    %c0_i32_1 = arith.constant 0 : i32
    return %c0_i32, %c0_i32_0 : i32, i32
  }
  func.func @transform_3(%arg0: i32) -> (i32, i32) {
    %c0_i32 = arith.constant 0 : i32
    %c0_i32_0 = arith.constant 0 : i32
    %c0_i32_1 = arith.constant 0 : i32
    return %c0_i32, %c0_i32_0 : i32, i32
  }
  func.func @transform_4(%arg0: i32) -> (i32, i32) {
    %c0_i32 = arith.constant 0 : i32
    %c0_i32_0 = arith.constant 0 : i32
    %c0_i32_1 = arith.constant 0 : i32
    return %c0_i32, %c0_i32_0 : i32, i32
  }
  func.func @transform_5(%arg0: i32) -> (i32, i32) {
    %c0_i32 = arith.constant 0 : i32
    %c0_i32_0 = arith.constant 0 : i32
    %c0_i32_1 = arith.constant 0 : i32
    return %c0_i32, %c0_i32_0 : i32, i32
  }
  func.func @transform_6(%arg0: i32) -> (i32, i32) {
    %c0_i32 = arith.constant 0 : i32
    %c0_i32_0 = arith.constant 0 : i32
    %c0_i32_1 = arith.constant 0 : i32
    return %c0_i32, %c0_i32_0 : i32, i32
  }
  func.func @transform_7(%arg0: i32) -> (i32, i32) {
    %c0_i32 = arith.constant 0 : i32
    %c0_i32_0 = arith.constant 0 : i32
    return %arg0, %c0_i32 : i32, i32
  }
}

</mosaic_0001>

<llo_original>
// kernel: tile.18
$region0: #{tile.18}
  #allocation0 [shape = 's32[1]{0}', space=sflag, size = 0x4, scoped, tag = 'scoped memory for tile.18']
  %s0 = inlined_call_operand.vmem [shape: f32[64], index: 0, kind: input, shape index: {}]
  %s1 = inlined_call_operand.vmem [shape: f32[4,64], index: 1, kind: output, shape index: {}]
  // Predicated region
  $region2: #{tile.18} parent=0 // pred_check
    _
  $region3: #{tile.18} parent=0 // pred_check_branch
    %3 = sbr.rel (0) target = $region5
  $region4: #{tile.18} parent=0 // pred_region
    _
  $region5: #{tile.18} parent=0 // pred_fallthru
    _
  %v4 = vld [vmem:[%s0] ss:$0 sm:$0xff]
  %5 = vst [vmem:[%s1] sm:$0xf] %v4

// kernel: tile.19
$region0: #{tile.19}
  %s0 = inlined_call_operand.vmem [shape: f32[4,64], index: 0, kind: input, shape index: {}]
  %s1 = inlined_call_operand.vmem [shape: f32[1,256], index: 1, kind: output, shape index: {}]
  $region1: #{tile.19} parent=0
    #allocation0 [shape = 'u8[8192]{0}', space=vmem, size = 0x2000, scoped, tag = 'scoped mem for output reshape']
    #allocation1 [shape = 'u8[4096]{0}', space=vmem, size = 0x1000, scoped, tag = 'scoped mem for input reshape']
    %s3 = sshll.u32 1, 4
    %s4 = ssub.s32 %s3, 1
    %v5 = vld [vmem:[%s0] sm:%s4]
    %6 = vst [vmem:[#allocation1] sm:%s4] %v5
    %s7 = smov 3
    %v8 = vld [vmem:[#allocation1] ss:$2 sm:%s7]
    %vm9 = vcmask 523264
    %10 = vst.msk [vmem:[#allocation0] ss:$8 sm:$0x3] %vm9, %v8
    %s11 = scalar_lea.vmem [#allocation1], 1
    %s12 = smov 3
    %v13 = vld [vmem:[%s11] ss:$2 sm:%s12]
    %14 = vrot.lane.b32.xlu0 %v13, 64
    %v15 = vpop.permute.xlu0 %14
    %vm16 = vcmask 1048064
    %17 = vst.msk [vmem:[#allocation0] ss:$8 sm:$0x3] %vm16, %v15
    %s19 = sshll.u32 1, 1
    %s20 = ssub.s32 %s19, 1
    %v22 = vld [vmem:[#allocation0] sm:%s20]
    %s23 = sshll.u32 1, 1
    %s24 = ssub.s32 %s23, 1
    %25 = vst [vmem:[%s1] sm:%s24] %v22
    %s26 = scalar_lea.vmem [#allocation0], 8
    %v27 = vld [vmem:[%s26] sm:%s20]
    %s28 = sshll.u32 1, 1
    %s29 = ssub.s32 %s28, 1
    %s30 = scalar_lea.vmem %s1, 1
    %31 = vst [vmem:[%s30] sm:%s29] %v27

// kernel: tile.28
$region0: #{tile.28}
  #allocation0 [shape = 's32[1]{0}', space=sflag, size = 0x4, scoped, tag = 'scoped memory for tile.28']
  %s0 = inlined_call_operand.vmem [shape: f32[16], index: 0, kind: input, shape index: {}]
  %s1 = inlined_call_operand.vmem [shape: f32[4,16], index: 1, kind: output, shape index: {}]
  // Predicated region
  $region2: #{tile.28} parent=0 // pred_check
    _
  $region3: #{tile.28} parent=0 // pred_check_branch
    %3 = sbr.rel (0) target = $region5
  $region4: #{tile.28} parent=0 // pred_region
    _
  $region5: #{tile.28} parent=0 // pred_fallthru
    _
  %v4 = vld [vmem:[%s0] ss:$0 sm:$0xff]
  %5 = vst [vmem:[%s1] sm:$0xf] %v4

// kernel: tile.29
$region0: #{tile.29}
  %s0 = inlined_call_operand.vmem [shape: f32[4,16], index: 0, kind: input, shape index: {}]
  %s1 = inlined_call_operand.vmem [shape: f32[1,64], index: 1, kind: output, shape index: {}]
  $region1: #{tile.29} parent=0
    #allocation0 [shape = 'u8[4096]{0}', space=vmem, size = 0x1000, scoped, tag = 'scoped mem for output reshape']
    #allocation1 [shape = 'u8[4096]{0}', space=vmem, size = 0x1000, scoped, tag = 'scoped mem for input reshape']
    %s3 = sshll.u32 1, 4
    %s4 = ssub.s32 %s3, 1
    %v5 = vld [vmem:[%s0] sm:%s4]
    %6 = vst [vmem:[#allocation1] sm:%s4] %v5
    %v7 = vld [vmem:[#allocation1] sm:$0x1]
    %vm8 = vcmask 130048
    %9 = vst.msk [vmem:[#allocation0] sm:$0x1] %vm8, %v7
    %s10 = scalar_lea.vmem [#allocation1], 3
    %v11 = vld [vmem:[%s10] sm:$0x1]
    %12 = vrot.lane.b32.xlu0 %v11, 48
    %v13 = vpop.permute.xlu0 %12
    %vm14 = vcmask 523648
    %15 = vst.msk [vmem:[#allocation0] sm:$0x1] %vm14, %v13
    %s16 = scalar_lea.vmem [#allocation1], 2
    %v17 = vld [vmem:[%s16] sm:$0x1]
    %18 = vrot.lane.b32.xlu0 %v17, 32
    %v19 = vpop.permute.xlu0 %18
    %vm20 = vcmask 392448
    %21 = vst.msk [vmem:[#allocation0] sm:$0x1] %vm20, %v19
    %s22 = scalar_lea.vmem [#allocation1], 1
    %v23 = vld [vmem:[%s22] sm:$0x1]
    %24 = vrot.lane.b32.xlu0 %v23, 16
    %v25 = vpop.permute.xlu0 %24
    %vm26 = vcmask 261248
    %27 = vst.msk [vmem:[#allocation0] sm:$0x1] %vm26, %v25
    %s29 = sshll.u32 1, 1
    %s30 = ssub.s32 %s29, 1
    %v32 = vld [vmem:[#allocation0] sm:%s30]
    %s33 = sshll.u32 1, 1
    %s34 = ssub.s32 %s33, 1
    %35 = vst [vmem:[%s1] sm:%s34] %v32

// kernel: model_multi_forward.1
$region0: #{model_multi_forward.1}
  #allocation0 [shape = 'u32[]', space=smem, size = 0x4, offset = 0x4, fixed_abs, tag = 'smem constant byte address 0x4 - core index']
  #allocation1 [shape = 'u32[144,128]{1,0:T(1,128)}', space=vmem, size = 0x12000, scoped, tag = 'internal scratch']
  %s0 = inlined_call_operand.vmem [shape: f32[64,64], index: 0, kind: input, shape index: {}]
  %s1 = inlined_call_operand.vmem [shape: bf16[64,256], index: 1, kind: input, shape index: {}]
  %s2 = inlined_call_operand.vmem [shape: f32[1,256], index: 2, kind: input, shape index: {}]
  %s3 = inlined_call_operand.vmem [shape: bf16[256,256], index: 3, kind: input, shape index: {}]
  %s4 = inlined_call_operand.vmem [shape: f32[1,256], index: 4, kind: input, shape index: {}]
  %s5 = inlined_call_operand.vmem [shape: bf16[256,64], index: 5, kind: input, shape index: {}]
  %s6 = inlined_call_operand.vmem [shape: f32[1,64], index: 6, kind: input, shape index: {}]
  %s7 = inlined_call_operand.vmem [shape: f32[64,64], index: 7, kind: output, shape index: {}]
  %s8 = sld [smem:[#allocation0]]
  $region61: #{model_multi_forward.1} parent=0
    _
  %s10 = ssub.s32 1, %s8
  %s11 = scalar_select 0, %s10, %s8
  loop: start=0, step=1, limit=4
  $region2: #{model_multi_forward.1} parent=0 // loop_pre_header
    _
  $region3: #{model_multi_forward.1} parent=0 // loop_header
    %s13 = sphi 0, %s17
    %p14 = scmp.ge.s32.totalorder %s13, 4
    %s23 = sphi 0, %s25
    %s26 = sphi 0, %s23
    %s27 = sphi 0, %s26
    %s43 = sphi 0, %s27
    %s47 = sphi 0, %s47
    %s49 = sphi 0, %s47
    %s50 = sphi 0, %s49
    %s64 = sphi 0, %s50
    %s68 = sphi 0, %s68
    %s70 = sphi 0, %s68
    %s71 = sphi 0, %s70
    %s85 = sphi 0, %s71
    %s89 = sphi 0, %s89
    %s91 = sphi 0, %s89
    %s92 = sphi 0, %s91
    %s106 = sphi 0, %s92
    %s110 = sphi 0, %s110
    %s112 = sphi 0, %s110
    %s113 = sphi 0, %s112
    %s127 = sphi 0, %s113
    %s131 = sphi 0, %s131
    %s133 = sphi 0, %s131
    %s134 = sphi 0, %s133
    %s148 = sphi 0, %s134
    %s152 = sphi 0, %s152
    %s154 = sphi 0, %s152
    %s155 = sphi 0, %s154
    %s169 = sphi 0, %s155
    %s175 = sphi 0, %s177
    %s178 = sphi 0, %s175
    %s179 = sphi 0, %s178
    %s195 = sphi 0, %s179
  $region4: #{model_multi_forward.1} parent=0 // loop_header_branch
    %16 = sbr.rel (%p14) target = $region8
  $region5: #{model_multi_forward.1} parent=0 // loop_body
    %s18 = ssub.s32 %s13, 1
    %s19 = ssub.s32 %s13, 2
    %s20 = sadd.s32 %s13, 1
    %s21 = ssub.s32 %s13, %s20
    %p22 = scmp.eq.s32.totalorder %s21, 0
    %s24 = sadd.s32 %s23, 1
    %s25 = scalar_select %p22, %s23, %s24
    %p28 = pneg %p22
    %p29 = scmp.eq.s32.totalorder %s13, 1
    %p30 = por %p28, %p29
    %p31 = scmp.ne.s32.totalorder %s23, %s26
    %p32 = scmp.eq.s32.totalorder %s13, 0
    %p33 = por %p31, %p32
    %p34 = scmp.ne.s32.totalorder %s23, %s26
    %p35 = scmp.eq.s32.totalorder %s18, 1
    %p36 = por %p34, %p35
    %p37 = scmp.ne.s32.totalorder %s26, %s27
    %p38 = scmp.eq.s32.totalorder %s18, 0
    %p39 = por %p37, %p38
    %p40 = scmp.ne.s32.totalorder %s26, %s27
    %p41 = scmp.eq.s32.totalorder %s19, 1
    %p42 = por %p40, %p41
    %p44 = scmp.ne.s32.totalorder %s27, %s43
    %p45 = scmp.eq.s32.totalorder %s19, 0
    %p46 = por %p44, %p45
    %s48 = sadd.s32 %s47, 1
    %p51 = scmp.eq.s32.totalorder %s13, 1
    %p52 = scmp.ne.s32.totalorder %s47, %s49
    %p53 = scmp.eq.s32.totalorder %s13, 0
    %p54 = por %p52, %p53
    %p55 = scmp.ne.s32.totalorder %s47, %s49
    %p56 = scmp.eq.s32.totalorder %s18, 1
    %p57 = por %p55, %p56
    %p58 = scmp.ne.s32.totalorder %s49, %s50
    %p59 = scmp.eq.s32.totalorder %s18, 0
    %p60 = por %p58, %p59
    %p61 = scmp.ne.s32.totalorder %s49, %s50
    %p62 = scmp.eq.s32.totalorder %s19, 1
    %p63 = por %p61, %p62
    %p65 = scmp.ne.s32.totalorder %s50, %s64
    %p66 = scmp.eq.s32.totalorder %s19, 0
    %p67 = por %p65, %p66
    %s69 = sadd.s32 %s68, 1
    %p72 = scmp.eq.s32.totalorder %s13, 1
    %p73 = scmp.ne.s32.totalorder %s68, %s70
    %p74 = scmp.eq.s32.totalorder %s13, 0
    %p75 = por %p73, %p74
    %p76 = scmp.ne.s32.totalorder %s68, %s70
    %p77 = scmp.eq.s32.totalorder %s18, 1
    %p78 = por %p76, %p77
    %p79 = scmp.ne.s32.totalorder %s70, %s71
    %p80 = scmp.eq.s32.totalorder %s18, 0
    %p81 = por %p79, %p80
    %p82 = scmp.ne.s32.totalorder %s70, %s71
    %p83 = scmp.eq.s32.totalorder %s19, 1
    %p84 = por %p82, %p83
    %p86 = scmp.ne.s32.totalorder %s71, %s85
    %p87 = scmp.eq.s32.totalorder %s19, 0
    %p88 = por %p86, %p87
    %s90 = sadd.s32 %s89, 1
    %p93 = scmp.eq.s32.totalorder %s13, 1
    %p94 = scmp.ne.s32.totalorder %s89, %s91
    %p95 = scmp.eq.s32.totalorder %s13, 0
    %p96 = por %p94, %p95
    %p97 = scmp.ne.s32.totalorder %s89, %s91
    %p98 = scmp.eq.s32.totalorder %s18, 1
    %p99 = por %p97, %p98
    %p100 = scmp.ne.s32.totalorder %s91, %s92
    %p101 = scmp.eq.s32.totalorder %s18, 0
    %p102 = por %p100, %p101
    %p103 = scmp.ne.s32.totalorder %s91, %s92
    %p104 = scmp.eq.s32.totalorder %s19, 1
    %p105 = por %p103, %p104
    %p107 = scmp.ne.s32.totalorder %s92, %s106
    %p108 = scmp.eq.s32.totalorder %s19, 0
    %p109 = por %p107, %p108
    %s111 = sadd.s32 %s110, 1
    %p114 = scmp.eq.s32.totalorder %s13, 1
    %p115 = scmp.ne.s32.totalorder %s110, %s112
    %p116 = scmp.eq.s32.totalorder %s13, 0
    %p117 = por %p115, %p116
    %p118 = scmp.ne.s32.totalorder %s110, %s112
    %p119 = scmp.eq.s32.totalorder %s18, 1
    %p120 = por %p118, %p119
    %p121 = scmp.ne.s32.totalorder %s112, %s113
    %p122 = scmp.eq.s32.totalorder %s18, 0
    %p123 = por %p121, %p122
    %p124 = scmp.ne.s32.totalorder %s112, %s113
    %p125 = scmp.eq.s32.totalorder %s19, 1
    %p126 = por %p124, %p125
    %p128 = scmp.ne.s32.totalorder %s113, %s127
    %p129 = scmp.eq.s32.totalorder %s19, 0
    %p130 = por %p128, %p129
    %s132 = sadd.s32 %s131, 1
    %p135 = scmp.eq.s32.totalorder %s13, 1
    %p136 = scmp.ne.s32.totalorder %s131, %s133
    %p137 = scmp.eq.s32.totalorder %s13, 0
    %p138 = por %p136, %p137
    %p139 = scmp.ne.s32.totalorder %s131, %s133
    %p140 = scmp.eq.s32.totalorder %s18, 1
    %p141 = por %p139, %p140
    %p142 = scmp.ne.s32.totalorder %s133, %s134
    %p143 = scmp.eq.s32.totalorder %s18, 0
    %p144 = por %p142, %p143
    %p145 = scmp.ne.s32.totalorder %s133, %s134
    %p146 = scmp.eq.s32.totalorder %s19, 1
    %p147 = por %p145, %p146
    %p149 = scmp.ne.s32.totalorder %s134, %s148
    %p150 = scmp.eq.s32.totalorder %s19, 0
    %p151 = por %p149, %p150
    %s153 = sadd.s32 %s152, 1
    %p156 = scmp.eq.s32.totalorder %s13, 1
    %p157 = scmp.ne.s32.totalorder %s152, %s154
    %p158 = scmp.eq.s32.totalorder %s13, 0
    %p159 = por %p157, %p158
    %p160 = scmp.ne.s32.totalorder %s152, %s154
    %p161 = scmp.eq.s32.totalorder %s18, 1
    %p162 = por %p160, %p161
    %p163 = scmp.ne.s32.totalorder %s154, %s155
    %p164 = scmp.eq.s32.totalorder %s18, 0
    %p165 = por %p163, %p164
    %p166 = scmp.ne.s32.totalorder %s154, %s155
    %p167 = scmp.eq.s32.totalorder %s19, 1
    %p168 = por %p166, %p167
    %p170 = scmp.ne.s32.totalorder %s155, %s169
    %p171 = scmp.eq.s32.totalorder %s19, 0
    %p172 = por %p170, %p171
    %s173 = ssub.s32 %s13, %s20
    %p174 = scmp.eq.s32.totalorder %s173, 0
    %s176 = sadd.s32 %s175, 1
    %s177 = scalar_select %p174, %s175, %s176
    %p180 = pneg %p174
    %p181 = scmp.eq.s32.totalorder %s13, 1
    %p182 = por %p180, %p181
    %p183 = scmp.ne.s32.totalorder %s175, %s178
    %p184 = scmp.eq.s32.totalorder %s13, 0
    %p185 = por %p183, %p184
    %p186 = scmp.ne.s32.totalorder %s175, %s178
    %p187 = scmp.eq.s32.totalorder %s18, 1
    %p188 = por %p186, %p187
    %p189 = scmp.ne.s32.totalorder %s178, %s179
    %p190 = scmp.eq.s32.totalorder %s18, 0
    %p191 = por %p189, %p190
    %p192 = scmp.ne.s32.totalorder %s178, %s179
    %p193 = scmp.eq.s32.totalorder %s19, 1
    %p194 = por %p192, %p193
    %p196 = scmp.ne.s32.totalorder %s179, %s195
    %p197 = scmp.eq.s32.totalorder %s19, 0
    %p198 = por %p196, %p197
    %p199 = scmp.le.s32.totalorder 1, %s13
    %p200 = scmp.lt.s32.totalorder %s13, 3
    %p201 = pnand %p199, %p200
    %p202 = pneg %p201
    // Predicated region
    $region9: #{model_multi_forward.1} parent=5 // pred_check
      _
    $region10: #{model_multi_forward.1} parent=5 // pred_check_branch
      %204 = sbr.rel (%p201) target = $region12
    $region11: #{model_multi_forward.1} parent=5 // pred_region
      %s205 = ssub.s32 %s13, 1
      // Predicated region
      $region13: #{model_multi_forward.1} parent=11 // pred_check
        %p206 = pneg %p60
      $region14: #{model_multi_forward.1} parent=11 // pred_check_branch
        %208 = sbr.rel (%p206) target = $region16
      $region15: #{model_multi_forward.1} parent=11 // pred_region
        _
      $region16: #{model_multi_forward.1} parent=11 // pred_fallthru
        _
      // Predicated region
      $region17: #{model_multi_forward.1} parent=11 // pred_check
        %p209 = pneg %p81
      $region18: #{model_multi_forward.1} parent=11 // pred_check_branch
        %211 = sbr.rel (%p209) target = $region20
      $region19: #{model_multi_forward.1} parent=11 // pred_region
        _
      $region20: #{model_multi_forward.1} parent=11 // pred_fallthru
        _
      // Predicated region
      $region21: #{model_multi_forward.1} parent=11 // pred_check
        %p212 = pneg %p102
      $region22: #{model_multi_forward.1} parent=11 // pred_check_branch
        %214 = sbr.rel (%p212) target = $region24
      $region23: #{model_multi_forward.1} parent=11 // pred_region
        _
      $region24: #{model_multi_forward.1} parent=11 // pred_fallthru
        _
      // Predicated region
      $region25: #{model_multi_forward.1} parent=11 // pred_check
        %p215 = pneg %p123
      $region26: #{model_multi_forward.1} parent=11 // pred_check_branch
        %217 = sbr.rel (%p215) target = $region28
      $region27: #{model_multi_forward.1} parent=11 // pred_region
        _
      $region28: #{model_multi_forward.1} parent=11 // pred_fallthru
        _
      // Predicated region
      $region29: #{model_multi_forward.1} parent=11 // pred_check
        %p218 = pneg %p144
      $region30: #{model_multi_forward.1} parent=11 // pred_check_branch
        %220 = sbr.rel (%p218) target = $region32
      $region31: #{model_multi_forward.1} parent=11 // pred_region
        _
      $region32: #{model_multi_forward.1} parent=11 // pred_fallthru
        _
      // Predicated region
      $region33: #{model_multi_forward.1} parent=11 // pred_check
        %p221 = pneg %p165
      $region34: #{model_multi_forward.1} parent=11 // pred_check_branch
        %223 = sbr.rel (%p221) target = $region36
      $region35: #{model_multi_forward.1} parent=11 // pred_region
        _
      $region36: #{model_multi_forward.1} parent=11 // pred_fallthru
        _
    $region12: #{model_multi_forward.1} parent=5 // pred_fallthru
      _
    %p224 = scmp.lt.s32.totalorder %s13, 2
    // Predicated region
    $region37: #{model_multi_forward.1} parent=5 // pred_check
      %p225 = pneg %p224
    $region38: #{model_multi_forward.1} parent=5 // pred_check_branch
      %227 = sbr.rel (%p225) target = $region40
    $region39: #{model_multi_forward.1} parent=5 // pred_region
      // Predicated region
      $region41: #{model_multi_forward.1} parent=39 // pred_check
        %p228 = pneg %p33
      $region42: #{model_multi_forward.1} parent=39 // pred_check_branch
        %230 = sbr.rel (%p228) target = $region44
      $region43: #{model_multi_forward.1} parent=39 // pred_region
        %s231 = smul.u32 4, %s13
        %p232 = scmp.lt.s32.totalorder %s231, 7
        %s233 = scalar_select %p232, %s231, 7
        %s234 = smul.addr %s233, 8
        %s235 = scalar_lea.vmem %s0, %s234
        %s236 = smul.u32 4, %s13
      $region44: #{model_multi_forward.1} parent=39 // pred_fallthru
        _
    $region40: #{model_multi_forward.1} parent=5 // pred_fallthru
      _
    %p237 = scmp.le.s32.totalorder 1, %s13
    %p238 = scmp.lt.s32.totalorder %s13, 3
    %p239 = pnand %p237, %p238
    %p240 = pneg %p239
    // Predicated region
    $region45: #{model_multi_forward.1} parent=5 // pred_check
      _
    $region46: #{model_multi_forward.1} parent=5 // pred_check_branch
      %242 = sbr.rel (%p239) target = $region48
    $region47: #{model_multi_forward.1} parent=5 // pred_region
      %s243 = ssub.s32 %s13, 1
      %s244 = smul.u32 4, %s18
      %p245 = scmp.lt.s32.totalorder %s244, 7
      %s246 = scalar_select %p245, %s244, 7
      %s247 = smul.addr %s246, 8
      %s248 = scalar_lea.vmem %s0, %s247
      %p249 = pneg %p39
      %p250 = pneg %p36
      %p251 = pneg %p60
      %p252 = pneg %p57
      %p253 = pneg %p81
      %p254 = pneg %p78
      %p255 = pneg %p102
      %p256 = pneg %p99
      %p257 = pneg %p123
      %p258 = pneg %p120
      %p259 = pneg %p144
      %p260 = pneg %p141
      %p261 = pneg %p165
      %p262 = pneg %p162
      %p263 = pneg %p191
      %p264 = pneg %p188
      %s265 = smul.u32 4, %s18
      %p266 = scmp.lt.s32.totalorder %s265, 7
      %s267 = scalar_select %p266, %s265, 7
      %s268 = smul.addr %s267, 8
      %s269 = scalar_lea.vmem %s7, %s268
      %s270 = smul.u32 4, %s18
      %p271 = scmp.lt.s32.totalorder %s270, 7
      %s272 = scalar_select %p271, %s270, 7
      %s273 = smul.addr %s272, 8
      %s274 = scalar_lea.vmem %s0, %s273
      %s275 = smul.u32 4, %s18
      %s276 = smul.u32 4, %s18
      %p277 = scmp.lt.s32.totalorder %s276, 7
      %s278 = scalar_select %p277, %s276, 7
      %s279 = smul.addr %s278, 8
      %s280 = scalar_lea.vmem %s7, %s279
      %s281 = smul.u32 4, %s18
      %v283 = vld [vmem:[%s274] sm:$0xff]
      %v284 = vld [vmem:[%s274 + $0x8] sm:$0xff]
      %v285 = vld [vmem:[%s274 + $0x10] sm:$0xff]
      %v286 = vld [vmem:[%s274 + $0x18] sm:$0xff]
      %v287 = vpack.c.bf16 %v284, %v283
      %v288 = vpack.c.bf16 %v286, %v285
      %v289 = vld [vmem:[%s1] sm:$0xff]
      %v290 = vld [vmem:[%s1 + $0x8] sm:$0xff]
      %v291 = vld [vmem:[%s1 + $0x10] sm:$0xff]
      %v292 = vld [vmem:[%s1 + $0x18] sm:$0xff]
      %v293 = vld [vmem:[%s1 + $0x20] sm:$0xff]
      %v294 = vld [vmem:[%s1 + $0x28] sm:$0xff]
      %v295 = vld [vmem:[%s1 + $0x30] sm:$0xff]
      %v296 = vld [vmem:[%s1 + $0x38] sm:$0xff]
      %v297 = vld [vmem:[%s2] sm:$0x3]
      %v299 = vlaneseq
      %v300 = vshrl.u32 %v299, 7
      %v301 = vsub.s32 0, %v300
      %v302 = vrot.slane %v297, %v301
      %v303 = vlaneseq
      %v304 = vshrl.u32 %v303, 7
      %v305 = vsub.s32 1, %v304
      %v306 = vrot.slane %v297, %v305
      %v317 = vunpack.c.l.b16 %v289
      %v318 = vunpack.c.h.b16 %v289
      %v319 = vunpack.c.l.b16 %v290
      %v320 = vunpack.c.h.b16 %v290
      %v321 = vunpack.c.l.b16 %v291
      %v322 = vunpack.c.h.b16 %v291
      %v323 = vunpack.c.l.b16 %v292
      %v324 = vunpack.c.h.b16 %v292
      %v325 = vunpack.c.l.b16 %v293
      %v326 = vunpack.c.h.b16 %v293
      %v327 = vunpack.c.l.b16 %v294
      %v328 = vunpack.c.h.b16 %v294
      %v329 = vunpack.c.l.b16 %v295
      %v330 = vunpack.c.h.b16 %v295
      %v331 = vunpack.c.l.b16 %v296
      %v332 = vunpack.c.h.b16 %v296
      %v333 = vpack.c.b16 %v319, %v317
      %v334 = vpack.c.b16 %v320, %v318
      %v335 = vpack.c.b16 %v323, %v321
      %v336 = vpack.c.b16 %v324, %v322
      %v337 = vpack.c.b16 %v327, %v325
      %v338 = vpack.c.b16 %v328, %v326
      %v339 = vpack.c.b16 %v331, %v329
      %v340 = vpack.c.b16 %v332, %v330
      %vm349 = vcmask 523264
      %v351 = vsel %vm349, %v287, 0
      %v354 = vsel %vm349, %v288, 0
      %356 = vmatprep.subr.bf16.mxu0 0
      %357 = vmatpush1.bf16.msra.mxu0 0
      %358 = vmatprep.subr.bf16.mxu0 0
      %359 = vmatpush1.bf16.msra.mxu0 0
      %360 = vmatprep.subr.bf16.mxu0 0
      %361 = vmatpush1.bf16.msra.mxu0 0
      %362 = vmatprep.subr.bf16.mxu0 0
      %363 = vmatpush1.bf16.msra.mxu0 0
      %364 = vmatprep.subr.bf16.mxu0 %v340
      %365 = vmatpush1.bf16.msra.mxu0 %v339
      %366 = vmatprep.subr.bf16.mxu0 %v338
      %367 = vmatpush1.bf16.msra.mxu0 %v337
      %368 = vmatprep.subr.bf16.mxu0 %v336
      %369 = vmatpush1.bf16.msra.mxu0 %v335
      %370 = vmatprep.subr.bf16.mxu0 %v334
      %371 = vmatpush1.bf16.msra.mxu0 %v333
      %372 = vmatprep.subr.bf16.mxu0 0
      %373 = vmatpush2.bf16.msra.mxu0 0
      %374 = vmatprep.subr.bf16.mxu0 0
      %375 = vmatpush2.bf16.msra.mxu0 0
      %376 = vmatprep.subr.bf16.mxu0 0
      %377 = vmatpush2.bf16.msra.mxu0 0
      %378 = vmatprep.subr.bf16.mxu0 0
      %379 = vmatpush2.bf16.msra.mxu0 0
      %380 = vmatprep.subr.bf16.mxu0 0
      %381 = vmatpush2.bf16.msra.mxu0 0
      %382 = vmatprep.subr.bf16.mxu0 0
      %383 = vmatpush2.bf16.msra.mxu0 0
      %384 = vmatprep.subr.bf16.mxu0 0
      %385 = vmatpush2.bf16.msra.mxu0 0
      %386 = vmatprep.subr.bf16.mxu0 0
      %387 = vmatpush2.bf16.msra.mxu0 0
      %388 = vmatprep.mubr.bf16.mxu0 0
      %389 = vmatmul.mubr.bf16.gmra.mxu0 %v351
      %v390 = vpop.f32.mrf.mxu0
      %v391 = vadd.f32 %v302, %v390
      %v392 = vpop.f32.mrf.mxu0
      %v393 = vadd.f32 %v306, %v392
      %v394 = vpop.f32.mrf.mxu0
      %v395 = vadd.f32 %v302, %v394
      %v396 = vpop.f32.mrf.mxu0
      %v397 = vadd.f32 %v306, %v396
      %398 = vmatprep.mubr.bf16.mxu0 0
      %399 = vmatmul.mubr.bf16.gmra.mxu0 %v354
      %v400 = vpop.f32.mrf.mxu0
      %v401 = vadd.f32 %v302, %v400
      %v402 = vpop.f32.mrf.mxu0
      %v403 = vadd.f32 %v306, %v402
      %v404 = vpop.f32.mrf.mxu0
      %v405 = vadd.f32 %v302, %v404
      %v406 = vpop.f32.mrf.mxu0
      %v407 = vadd.f32 %v306, %v406
      %408 = vdwg.mxu0
      %v409 = vmax.f32 %v391, 0.0
      %v410 = vmax.f32 %v393, 0.0
      %v411 = vmax.f32 %v395, 0.0
      %v412 = vmax.f32 %v397, 0.0
      %v413 = vmax.f32 %v401, 0.0
      %v414 = vmax.f32 %v403, 0.0
      %v415 = vmax.f32 %v405, 0.0
      %v416 = vmax.f32 %v407, 0.0
      %v417 = vpack.c.bf16 %v411, %v409
      %v418 = vpack.c.bf16 %v412, %v410
      %v419 = vpack.c.bf16 %v415, %v413
      %v420 = vpack.c.bf16 %v416, %v414
      %v421 = vld [vmem:[%s3] sm:$0xff]
      %v422 = vld [vmem:[%s3 + $0x8] sm:$0xff]
      %v423 = vld [vmem:[%s3 + $0x10] sm:$0xff]
      %v424 = vld [vmem:[%s3 + $0x18] sm:$0xff]
      %v425 = vld [vmem:[%s3 + $0x20] sm:$0xff]
      %v426 = vld [vmem:[%s3 + $0x28] sm:$0xff]
      %v427 = vld [vmem:[%s3 + $0x30] sm:$0xff]
      %v428 = vld [vmem:[%s3 + $0x38] sm:$0xff]
      %v429 = vld [vmem:[%s3 + $0x40] sm:$0xff]
      %v430 = vld [vmem:[%s3 + $0x48] sm:$0xff]
      %v431 = vld [vmem:[%s3 + $0x50] sm:$0xff]
      %v432 = vld [vmem:[%s3 + $0x58] sm:$0xff]
      %v433 = vld [vmem:[%s3 + $0x60] sm:$0xff]
      %v434 = vld [vmem:[%s3 + $0x68] sm:$0xff]
      %v435 = vld [vmem:[%s3 + $0x70] sm:$0xff]
      %v436 = vld [vmem:[%s3 + $0x78] sm:$0xff]
      %v437 = vld [vmem:[%s3 + $0x80] sm:$0xff]
      %v438 = vld [vmem:[%s3 + $0x88] sm:$0xff]
      %v439 = vld [vmem:[%s3 + $0x90] sm:$0xff]
      %v440 = vld [vmem:[%s3 + $0x98] sm:$0xff]
      %v441 = vld [vmem:[%s3 + $0xa0] sm:$0xff]
      %v442 = vld [vmem:[%s3 + $0xa8] sm:$0xff]
      %v443 = vld [vmem:[%s3 + $0xb0] sm:$0xff]
      %v444 = vld [vmem:[%s3 + $0xb8] sm:$0xff]
      %v445 = vld [vmem:[%s3 + $0xc0] sm:$0xff]
      %v446 = vld [vmem:[%s3 + $0xc8] sm:$0xff]
      %v447 = vld [vmem:[%s3 + $0xd0] sm:$0xff]
      %v448 = vld [vmem:[%s3 + $0xd8] sm:$0xff]
      %v449 = vld [vmem:[%s3 + $0xe0] sm:$0xff]
      %v450 = vld [vmem:[%s3 + $0xe8] sm:$0xff]
      %v451 = vld [vmem:[%s3 + $0xf0] sm:$0xff]
      %v452 = vld [vmem:[%s3 + $0xf8] sm:$0xff]
      %v453 = vld [vmem:[%s4] sm:$0x3]
      %v455 = vlaneseq
      %v456 = vshrl.u32 %v455, 7
      %v457 = vsub.s32 0, %v456
      %v458 = vrot.slane %v453, %v457
      %v459 = vlaneseq
      %v460 = vshrl.u32 %v459, 7
      %v461 = vsub.s32 1, %v460
      %v462 = vrot.slane %v453, %v461
      %v497 = vunpack.c.l.b16 %v421
      %v498 = vunpack.c.h.b16 %v421
      %v499 = vunpack.c.l.b16 %v422
      %v500 = vunpack.c.h.b16 %v422
      %v501 = vunpack.c.l.b16 %v423
      %v502 = vunpack.c.h.b16 %v423
      %v503 = vunpack.c.l.b16 %v424
      %v504 = vunpack.c.h.b16 %v424
      %v505 = vunpack.c.l.b16 %v425
      %v506 = vunpack.c.h.b16 %v425
      %v507 = vunpack.c.l.b16 %v426
      %v508 = vunpack.c.h.b16 %v426
      %v509 = vunpack.c.l.b16 %v427
      %v510 = vunpack.c.h.b16 %v427
      %v511 = vunpack.c.l.b16 %v428
      %v512 = vunpack.c.h.b16 %v428
      %v513 = vunpack.c.l.b16 %v429
      %v514 = vunpack.c.h.b16 %v429
      %v515 = vunpack.c.l.b16 %v430
      %v516 = vunpack.c.h.b16 %v430
      %v517 = vunpack.c.l.b16 %v431
      %v518 = vunpack.c.h.b16 %v431
      %v519 = vunpack.c.l.b16 %v432
      %v520 = vunpack.c.h.b16 %v432
      %v521 = vunpack.c.l.b16 %v433
      %v522 = vunpack.c.h.b16 %v433
      %v523 = vunpack.c.l.b16 %v434
      %v524 = vunpack.c.h.b16 %v434
      %v525 = vunpack.c.l.b16 %v435
      %v526 = vunpack.c.h.b16 %v435
      %v527 = vunpack.c.l.b16 %v436
      %v528 = vunpack.c.h.b16 %v436
      %v529 = vunpack.c.l.b16 %v437
      %v530 = vunpack.c.h.b16 %v437
      %v531 = vunpack.c.l.b16 %v438
      %v532 = vunpack.c.h.b16 %v438
      %v533 = vunpack.c.l.b16 %v439
      %v534 = vunpack.c.h.b16 %v439
      %v535 = vunpack.c.l.b16 %v440
      %v536 = vunpack.c.h.b16 %v440
      %v537 = vunpack.c.l.b16 %v441
      %v538 = vunpack.c.h.b16 %v441
      %v539 = vunpack.c.l.b16 %v442
      %v540 = vunpack.c.h.b16 %v442
      %v541 = vunpack.c.l.b16 %v443
      %v542 = vunpack.c.h.b16 %v443
      %v543 = vunpack.c.l.b16 %v444
      %v544 = vunpack.c.h.b16 %v444
      %v545 = vunpack.c.l.b16 %v445
      %v546 = vunpack.c.h.b16 %v445
      %v547 = vunpack.c.l.b16 %v446
      %v548 = vunpack.c.h.b16 %v446
      %v549 = vunpack.c.l.b16 %v447
      %v550 = vunpack.c.h.b16 %v447
      %v551 = vunpack.c.l.b16 %v448
      %v552 = vunpack.c.h.b16 %v448
      %v553 = vunpack.c.l.b16 %v449
      %v554 = vunpack.c.h.b16 %v449
      %v555 = vunpack.c.l.b16 %v450
      %v556 = vunpack.c.h.b16 %v450
      %v557 = vunpack.c.l.b16 %v451
      %v558 = vunpack.c.h.b16 %v451
      %v559 = vunpack.c.l.b16 %v452
      %v560 = vunpack.c.h.b16 %v452
      %v561 = vpack.c.b16 %v499, %v497
      %v562 = vpack.c.b16 %v500, %v498
      %v563 = vpack.c.b16 %v503, %v501
      %v564 = vpack.c.b16 %v504, %v502
      %v565 = vpack.c.b16 %v507, %v505
      %v566 = vpack.c.b16 %v508, %v506
      %v567 = vpack.c.b16 %v511, %v509
      %v568 = vpack.c.b16 %v512, %v510
      %v569 = vpack.c.b16 %v515, %v513
      %v570 = vpack.c.b16 %v516, %v514
      %v571 = vpack.c.b16 %v519, %v517
      %v572 = vpack.c.b16 %v520, %v518
      %v573 = vpack.c.b16 %v523, %v521
      %v574 = vpack.c.b16 %v524, %v522
      %v575 = vpack.c.b16 %v527, %v525
      %v576 = vpack.c.b16 %v528, %v526
      %v577 = vpack.c.b16 %v531, %v529
      %v578 = vpack.c.b16 %v532, %v530
      %v579 = vpack.c.b16 %v535, %v533
      %v580 = vpack.c.b16 %v536, %v534
      %v581 = vpack.c.b16 %v539, %v537
      %v582 = vpack.c.b16 %v540, %v538
      %v583 = vpack.c.b16 %v543, %v541
      %v584 = vpack.c.b16 %v544, %v542
      %v585 = vpack.c.b16 %v547, %v545
      %v586 = vpack.c.b16 %v548, %v546
      %v587 = vpack.c.b16 %v551, %v549
      %v588 = vpack.c.b16 %v552, %v550
      %v589 = vpack.c.b16 %v555, %v553
      %v590 = vpack.c.b16 %v556, %v554
      %v591 = vpack.c.b16 %v559, %v557
      %v592 = vpack.c.b16 %v560, %v558
      %625 = vmatprep.subr.bf16.mxu0 %v576
      %626 = vmatpush1.bf16.msra.mxu0 %v575
      %627 = vmatprep.subr.bf16.mxu0 %v574
      %628 = vmatpush1.bf16.msra.mxu0 %v573
      %629 = vmatprep.subr.bf16.mxu0 %v572
      %630 = vmatpush1.bf16.msra.mxu0 %v571
      %631 = vmatprep.subr.bf16.mxu0 %v570
      %632 = vmatpush1.bf16.msra.mxu0 %v569
      %633 = vmatprep.subr.bf16.mxu0 %v568
      %634 = vmatpush1.bf16.msra.mxu0 %v567
      %635 = vmatprep.subr.bf16.mxu0 %v566
      %636 = vmatpush1.bf16.msra.mxu0 %v565
      %637 = vmatprep.subr.bf16.mxu0 %v564
      %638 = vmatpush1.bf16.msra.mxu0 %v563
      %639 = vmatprep.subr.bf16.mxu0 %v562
      %640 = vmatpush1.bf16.msra.mxu0 %v561
      %641 = vmatprep.subr.bf16.mxu0 %v592
      %642 = vmatpush2.bf16.msra.mxu0 %v591
      %643 = vmatprep.subr.bf16.mxu0 %v590
      %644 = vmatpush2.bf16.msra.mxu0 %v589
      %645 = vmatprep.subr.bf16.mxu0 %v588
      %646 = vmatpush2.bf16.msra.mxu0 %v587
      %647 = vmatprep.subr.bf16.mxu0 %v586
      %648 = vmatpush2.bf16.msra.mxu0 %v585
      %649 = vmatprep.subr.bf16.mxu0 %v584
      %650 = vmatpush2.bf16.msra.mxu0 %v583
      %651 = vmatprep.subr.bf16.mxu0 %v582
      %652 = vmatpush2.bf16.msra.mxu0 %v581
      %653 = vmatprep.subr.bf16.mxu0 %v580
      %654 = vmatpush2.bf16.msra.mxu0 %v579
      %655 = vmatprep.subr.bf16.mxu0 %v578
      %656 = vmatpush2.bf16.msra.mxu0 %v577
      %657 = vmatprep.mubr.bf16.mxu0 %v418
      %658 = vmatmul.mubr.bf16.gmra.mxu0 %v417
      %v659 = vpop.f32.mrf.mxu0
      %v660 = vadd.f32 %v458, %v659
      %v661 = vpop.f32.mrf.mxu0
      %v662 = vadd.f32 %v462, %v661
      %v663 = vpop.f32.mrf.mxu0
      %v664 = vadd.f32 %v458, %v663
      %v665 = vpop.f32.mrf.mxu0
      %v666 = vadd.f32 %v462, %v665
      %667 = vmatprep.mubr.bf16.mxu0 %v420
      %668 = vmatmul.mubr.bf16.gmra.mxu0 %v419
      %v669 = vpop.f32.mrf.mxu0
      %v670 = vadd.f32 %v458, %v669
      %v671 = vpop.f32.mrf.mxu0
      %v672 = vadd.f32 %v462, %v671
      %v673 = vpop.f32.mrf.mxu0
      %v674 = vadd.f32 %v458, %v673
      %v675 = vpop.f32.mrf.mxu0
      %v676 = vadd.f32 %v462, %v675
      %677 = vdwg.mxu0
      %v678 = vmax.f32 %v660, 0.0
      %v679 = vmax.f32 %v662, 0.0
      %v680 = vmax.f32 %v664, 0.0
      %v681 = vmax.f32 %v666, 0.0
      %v682 = vmax.f32 %v670, 0.0
      %v683 = vmax.f32 %v672, 0.0
      %v684 = vmax.f32 %v674, 0.0
      %v685 = vmax.f32 %v676, 0.0
      %v686 = vpack.c.bf16 %v680, %v678
      %v687 = vpack.c.bf16 %v681, %v679
      %v688 = vpack.c.bf16 %v684, %v682
      %v689 = vpack.c.bf16 %v685, %v683
      %v690 = vld [vmem:[%s5] sm:$0xf]
      %v691 = vld [vmem:[%s5 + $0x4] sm:$0xf]
      %v692 = vld [vmem:[%s5 + $0x8] sm:$0xf]
      %v693 = vld [vmem:[%s5 + $0xc] sm:$0xf]
      %v694 = vld [vmem:[%s5 + $0x10] sm:$0xf]
      %v695 = vld [vmem:[%s5 + $0x14] sm:$0xf]
      %v696 = vld [vmem:[%s5 + $0x18] sm:$0xf]
      %v697 = vld [vmem:[%s5 + $0x1c] sm:$0xf]
      %v698 = vld [vmem:[%s5 + $0x20] sm:$0xf]
      %v699 = vld [vmem:[%s5 + $0x24] sm:$0xf]
      %v700 = vld [vmem:[%s5 + $0x28] sm:$0xf]
      %v701 = vld [vmem:[%s5 + $0x2c] sm:$0xf]
      %v702 = vld [vmem:[%s5 + $0x30] sm:$0xf]
      %v703 = vld [vmem:[%s5 + $0x34] sm:$0xf]
      %v704 = vld [vmem:[%s5 + $0x38] sm:$0xf]
      %v705 = vld [vmem:[%s5 + $0x3c] sm:$0xf]
      %v706 = vld [vmem:[%s5 + $0x40] sm:$0xf]
      %v707 = vld [vmem:[%s5 + $0x44] sm:$0xf]
      %v708 = vld [vmem:[%s5 + $0x48] sm:$0xf]
      %v709 = vld [vmem:[%s5 + $0x4c] sm:$0xf]
      %v710 = vld [vmem:[%s5 + $0x50] sm:$0xf]
      %v711 = vld [vmem:[%s5 + $0x54] sm:$0xf]
      %v712 = vld [vmem:[%s5 + $0x58] sm:$0xf]
      %v713 = vld [vmem:[%s5 + $0x5c] sm:$0xf]
      %v714 = vld [vmem:[%s5 + $0x60] sm:$0xf]
      %v715 = vld [vmem:[%s5 + $0x64] sm:$0xf]
      %v716 = vld [vmem:[%s5 + $0x68] sm:$0xf]
      %v717 = vld [vmem:[%s5 + $0x6c] sm:$0xf]
      %v718 = vld [vmem:[%s5 + $0x70] sm:$0xf]
      %v719 = vld [vmem:[%s5 + $0x74] sm:$0xf]
      %v720 = vld [vmem:[%s5 + $0x78] sm:$0xf]
      %v721 = vld [vmem:[%s5 + $0x7c] sm:$0xf]
      %v722 = vld [vmem:[%s6] sm:$0x1]
      %v724 = vlaneseq
      %v725 = vshrl.u32 %v724, 7
      %v726 = vsub.s32 0, %v725
      %v727 = vrot.slane %v722, %v726
      %v761 = vunpack.c.l.b16 %v690
      %v762 = vunpack.c.l.b16 %v691
      %v763 = vunpack.c.l.b16 %v692
      %v764 = vunpack.c.l.b16 %v693
      %v765 = vunpack.c.l.b16 %v694
      %v766 = vunpack.c.l.b16 %v695
      %v767 = vunpack.c.l.b16 %v696
      %v768 = vunpack.c.l.b16 %v697
      %v769 = vunpack.c.l.b16 %v698
      %v770 = vunpack.c.l.b16 %v699
      %v771 = vunpack.c.l.b16 %v700
      %v772 = vunpack.c.l.b16 %v701
      %v773 = vunpack.c.l.b16 %v702
      %v774 = vunpack.c.l.b16 %v703
      %v775 = vunpack.c.l.b16 %v704
      %v776 = vunpack.c.l.b16 %v705
      %v777 = vunpack.c.l.b16 %v706
      %v778 = vunpack.c.l.b16 %v707
      %v779 = vunpack.c.l.b16 %v708
      %v780 = vunpack.c.l.b16 %v709
      %v781 = vunpack.c.l.b16 %v710
      %v782 = vunpack.c.l.b16 %v711
      %v783 = vunpack.c.l.b16 %v712
      %v784 = vunpack.c.l.b16 %v713
      %v785 = vunpack.c.l.b16 %v714
      %v786 = vunpack.c.l.b16 %v715
      %v787 = vunpack.c.l.b16 %v716
      %v788 = vunpack.c.l.b16 %v717
      %v789 = vunpack.c.l.b16 %v718
      %v790 = vunpack.c.l.b16 %v719
      %v791 = vunpack.c.l.b16 %v720
      %v792 = vunpack.c.l.b16 %v721
      %v793 = vpack.c.b16 %v762, %v761
      %v794 = vpack.c.b16 %v764, %v763
      %v795 = vpack.c.b16 %v766, %v765
      %v796 = vpack.c.b16 %v768, %v767
      %v797 = vpack.c.b16 %v770, %v769
      %v798 = vpack.c.b16 %v772, %v771
      %v799 = vpack.c.b16 %v774, %v773
      %v800 = vpack.c.b16 %v776, %v775
      %v801 = vpack.c.b16 %v778, %v777
      %v802 = vpack.c.b16 %v780, %v779
      %v803 = vpack.c.b16 %v782, %v781
      %v804 = vpack.c.b16 %v784, %v783
      %v805 = vpack.c.b16 %v786, %v785
      %v806 = vpack.c.b16 %v788, %v787
      %v807 = vpack.c.b16 %v790, %v789
      %v808 = vpack.c.b16 %v792, %v791
      %825 = vmatprep.subr.bf16.mxu0 0
      %826 = vmatpush1.bf16.msra.mxu0 %v800
      %827 = vmatprep.subr.bf16.mxu0 0
      %828 = vmatpush1.bf16.msra.mxu0 %v799
      %829 = vmatprep.subr.bf16.mxu0 0
      %830 = vmatpush1.bf16.msra.mxu0 %v798
      %831 = vmatprep.subr.bf16.mxu0 0
      %832 = vmatpush1.bf16.msra.mxu0 %v797
      %833 = vmatprep.subr.bf16.mxu0 0
      %834 = vmatpush1.bf16.msra.mxu0 %v796
      %835 = vmatprep.subr.bf16.mxu0 0
      %836 = vmatpush1.bf16.msra.mxu0 %v795
      %837 = vmatprep.subr.bf16.mxu0 0
      %838 = vmatpush1.bf16.msra.mxu0 %v794
      %839 = vmatprep.subr.bf16.mxu0 0
      %840 = vmatpush1.bf16.msra.mxu0 %v793
      %841 = vmatprep.subr.bf16.mxu0 0
      %842 = vmatpush2.bf16.msra.mxu0 %v808
      %843 = vmatprep.subr.bf16.mxu0 0
      %844 = vmatpush2.bf16.msra.mxu0 %v807
      %845 = vmatprep.subr.bf16.mxu0 0
      %846 = vmatpush2.bf16.msra.mxu0 %v806
      %847 = vmatprep.subr.bf16.mxu0 0
      %848 = vmatpush2.bf16.msra.mxu0 %v805
      %849 = vmatprep.subr.bf16.mxu0 0
      %850 = vmatpush2.bf16.msra.mxu0 %v804
      %851 = vmatprep.subr.bf16.mxu0 0
      %852 = vmatpush2.bf16.msra.mxu0 %v803
      %853 = vmatprep.subr.bf16.mxu0 0
      %854 = vmatpush2.bf16.msra.mxu0 %v802
      %855 = vmatprep.subr.bf16.mxu0 0
      %856 = vmatpush2.bf16.msra.mxu0 %v801
      %857 = vmatprep.mubr.bf16.mxu0 %v687
      %858 = vmatmul.mubr.bf16.gmra.mxu0 %v686
      %v859 = vpop.f32.mrf.mxu0
      %v860 = vadd.f32 %v727, %v859
      %v861 = vpop.f32.mrf.mxu0
      %v862 = vpop.f32.mrf.mxu0
      %v863 = vadd.f32 %v727, %v862
      %v864 = vpop.f32.mrf.mxu0
      %865 = vmatprep.mubr.bf16.mxu0 %v689
      %866 = vmatmul.mubr.bf16.gmra.mxu0 %v688
      %v867 = vpop.f32.mrf.mxu0
      %v868 = vadd.f32 %v727, %v867
      %v869 = vpop.f32.mrf.mxu0
      %v870 = vpop.f32.mrf.mxu0
      %v871 = vadd.f32 %v727, %v870
      %v872 = vpop.f32.mrf.mxu0
      %873 = vdwg.mxu0
      %874 = vst.msk [vmem:[%s280] sm:$0xff] %vm349, %v860
      %875 = vst.msk [vmem:[%s280 + $0x8] sm:$0xff] %vm349, %v863
      %876 = vst.msk [vmem:[%s280 + $0x10] sm:$0xff] %vm349, %v868
      %877 = vst.msk [vmem:[%s280 + $0x18] sm:$0xff] %vm349, %v871
      %s878 = smul.u32 4, %s18
      %p879 = scmp.lt.s32.totalorder %s878, 7
      %s880 = scalar_select %p879, %s878, 7
      %s881 = smul.addr %s880, 8
      %s882 = scalar_lea.vmem %s7, %s881
      // Predicated region
      $region49: #{model_multi_forward.1} parent=47 // pred_check
        %p883 = pneg %p188
      $region50: #{model_multi_forward.1} parent=47 // pred_check_branch
        %885 = sbr.rel (%p883) target = $region52
      $region51: #{model_multi_forward.1} parent=47 // pred_region
        %s886 = smul.u32 4, %s18
      $region52: #{model_multi_forward.1} parent=47 // pred_fallthru
        _
    $region48: #{model_multi_forward.1} parent=5 // pred_fallthru
      _
    %p887 = scmp.le.s32.totalorder 2, %s13
    // Predicated region
    $region53: #{model_multi_forward.1} parent=5 // pred_check
      %p888 = pneg %p887
    $region54: #{model_multi_forward.1} parent=5 // pred_check_branch
      %890 = sbr.rel (%p888) target = $region56
    $region55: #{model_multi_forward.1} parent=5 // pred_region
      %s891 = ssub.s32 %s13, 2
      // Predicated region
      $region57: #{model_multi_forward.1} parent=55 // pred_check
        %p892 = pneg %p194
      $region58: #{model_multi_forward.1} parent=55 // pred_check_branch
        %894 = sbr.rel (%p892) target = $region60
      $region59: #{model_multi_forward.1} parent=55 // pred_region
        %s895 = smul.u32 4, %s19
        %p896 = scmp.lt.s32.totalorder %s895, 7
        %s897 = scalar_select %p896, %s895, 7
        %s898 = smul.addr %s897, 8
        %s899 = scalar_lea.vmem %s7, %s898
      $region60: #{model_multi_forward.1} parent=55 // pred_fallthru
        _
    $region56: #{model_multi_forward.1} parent=5 // pred_fallthru
      _
  $region6: #{model_multi_forward.1} parent=0 // loop_footer
    %s17 = sadd.s32 1, %s13
  $region7: #{model_multi_forward.1} parent=0 // loop_footer_branch
    %12 = sbr.rel target = $region3
  $region8: #{model_multi_forward.1} parent=0 // loop_exit
    _

</llo_original>
